<compile_context>
chip_gen: v5e
topology: v5e:2x2
jax: 0.10.0
libtpu: 0.0.40
codegen_flags: <defaults>
</compile_context>

<pallas_src>
import functools

import jax
import jax.numpy as jnp
from jax.experimental import pallas as pl
from jax.experimental.pallas import tpu as pltpu


def _round_up(x: int, m: int) -> int:
    return ((x + m - 1) // m) * m


def _patch_embed_kernel(p_ref, w_ref, b_ref, o_ref):
    # p_ref: (TM, K) compute dtype; w_ref: (K, H) compute dtype;
    # b_ref: (1, H) f32; o_ref: (TM, H) out dtype.  f32 accumulate on the MXU.
    acc = jnp.dot(p_ref[...], w_ref[...], preferred_element_type=jnp.float32)
    o_ref[...] = (acc + b_ref[...]).astype(o_ref.dtype)


def divide_into_patches(x, patch_size):
    """x: (B, C, H, W) -> (B, num_patches, C*p*p), matching torch semantics."""
    b, c, h, w = x.shape
    nv = h // patch_size
    nh = w // patch_size
    p = x.reshape(b, c, nv, patch_size, nh, patch_size)
    p = jnp.transpose(p, (0, 2, 4, 1, 3, 5))            # (B, nv, nh, C, p, p)
    return p.reshape(b, nv * nh, c * patch_size * patch_size)


def prepare_patch_embed_params(weight, bias, compute_dtype=jnp.bfloat16):
    """One-time parameter prep: transpose + cast (no lane padding).

    weight: (hidden, K) in PyTorch nn.Linear (out, in) convention.
    Returns (w_t (K, hidden) compute_dtype, b_row (1, hidden) f32, hidden).
    """
    hidden, _ = weight.shape
    w_t = weight.T.astype(compute_dtype)                 # (K, hidden)
    b_row = bias.reshape(1, hidden).astype(jnp.float32)  # (1, hidden)
    return w_t, b_row, hidden


def _choose_tile_m(m, tile_m, k, h, in_bytes, out_bytes):
    """Pick the M tile: a divisor of M (no pad / ragged block) that is a
    multiple of the sublane packing, capped by a VMEM budget and by ceil(M/4)
    so v7x's two TensorCores both get grid steps."""
    sublane = 16 if min(in_bytes, out_bytes) == 2 else 8
    if m <= sublane:
        return m                                         # full-extent block
    # VMEM budget (fits v5e's 16 MiB scoped default / v7x's 64 MiB physical):
    # double-buffered in/out tiles + (conservatively double-counted) weight.
    budget = 12 * 1024 * 1024
    resident = 2 * k * h * in_bytes + 2 * h * 4
    per_row = 2 * (k * in_bytes + h * out_bytes)
    tm_vmem = max(sublane, (budget - resident) // per_row)
    cap = max(sublane, min(tile_m, tm_vmem, _round_up(pl.cdiv(m, 4), sublane)))
    best = 0
    for d in range(sublane, cap + 1, sublane):
        if m % d == 0:
            best = d
    if best:
        return best
    if m <= min(tile_m, tm_vmem):
        return m                                         # full extent is legal
    return cap                                           # caller pads a small tail


def _patch_embed_2d(patches2d, w_t, b_row, out_dtype, tile_m=2048):
    m, k = patches2d.shape
    h = w_t.shape[1]
    tm = _choose_tile_m(m, tile_m, k, h,
                        patches2d.dtype.itemsize, jnp.dtype(out_dtype).itemsize)
    m_run = _round_up(m, tm)
    if m_run != m:
        # Rare fallback (no suitable divisor of M): pad only the tail rows.
        patches2d = jnp.pad(patches2d, ((0, m_run - m), (0, 0)))

    out = pl.pallas_call(
        _patch_embed_kernel,
        out_shape=jax.ShapeDtypeStruct((m_run, h), out_dtype),
        grid_spec=pl.GridSpec(
            grid=(m_run // tm,),
            in_specs=[
                pl.BlockSpec((tm, k), lambda i: (i, 0)),     # streamed patches
                pl.BlockSpec((k, h), lambda i: (0, 0)),      # resident weight
                pl.BlockSpec((1, h), lambda i: (0, 0)),      # resident bias
            ],
            out_specs=pl.BlockSpec((tm, h), lambda i: (i, 0)),
        ),
        compiler_params=pltpu.CompilerParams(
            # Independent M tiles -> shard across v7x's two TensorCores.
            dimension_semantics=("parallel",),
            # Allow XLA (under jit) to fuse the patchify transpose/cast
            # producer into this kernel's input stream (one less HBM pass).
            allow_input_fusion=[True, False, False],
        ),
    )(patches2d, w_t, b_row)

    if m_run != m:
        out = out[:m]
    return out


def patch_module_forward_prepared(x, w_t, b_row, hidden, patch_size,
                                  compute_dtype=jnp.bfloat16, tile_m=2048):
    """Patch embedding with pre-prepared (transposed, cast) params."""
    b = x.shape[0]
    patches = divide_into_patches(x, patch_size).astype(compute_dtype)  # (B,N,K)
    n, k = patches.shape[1], patches.shape[2]
    out2d = _patch_embed_2d(patches.reshape(b * n, k), w_t, b_row, x.dtype,
                            tile_m=tile_m)
    return out2d.reshape(b, n, hidden)


def patch_module_forward(x, weight, bias, patch_size,
                         compute_dtype=jnp.bfloat16, tile_m=2048):
    """Drop-in equivalent of the patch embedding (torch (out,in) weight layout)."""
    w_t, b_row, hidden = prepare_patch_embed_params(weight, bias, compute_dtype)
    return patch_module_forward_prepared(x, w_t, b_row, hidden, patch_size,
                                         compute_dtype=compute_dtype,
                                         tile_m=tile_m)


if __name__ == "__main__":
    patch_size = 4
    hidden_size = 32
    batch, channels, height, width = 2, 3, 16, 16   # channels fixed to 3 by the module

    key = jax.random.PRNGKey(0)
    kx, kw, kb = jax.random.split(key, 3)

    x = jax.random.normal(kx, (batch, channels, height, width), dtype=jnp.float32)

    in_features = 3 * patch_size * patch_size
    bound = 1.0 / (in_features ** 0.5)
    weight = jax.random.uniform(kw, (hidden_size, in_features),
                                minval=-bound, maxval=bound, dtype=jnp.float32)
    bias = jax.random.uniform(kb, (hidden_size,),
                              minval=-bound, maxval=bound, dtype=jnp.float32)

    n_patches = (height // patch_size) * (width // patch_size)
    ref = divide_into_patches(x, patch_size) @ weight.T + bias   # f32 reference

    # Fast path: bf16 streams + f32 MXU accumulate, jitted so the patchify
    # transpose / cast fuse into the kernel's input.
    w_bf, b_row, hidden = prepare_patch_embed_params(weight, bias, jnp.bfloat16)
    fwd_bf16 = jax.jit(functools.partial(
        patch_module_forward_prepared, w_t=w_bf, b_row=b_row, hidden=hidden,
        patch_size=patch_size, compute_dtype=jnp.bfloat16))
    out_bf16 = jax.block_until_ready(fwd_bf16(x))
    assert out_bf16.shape == (batch, n_patches, hidden_size)
    assert out_bf16.dtype == x.dtype
    assert jnp.allclose(out_bf16, ref, atol=5e-2, rtol=5e-2)

    # Full-precision path through the same kernel: tight check.
    w_f32, b_row32, _ = prepare_patch_embed_params(weight, bias, jnp.float32)
    fwd_f32 = jax.jit(functools.partial(
        patch_module_forward_prepared, w_t=w_f32, b_row=b_row32, hidden=hidden,
        patch_size=patch_size, compute_dtype=jnp.float32))
    out_f32 = jax.block_until_ready(fwd_f32(x))
    assert jnp.allclose(out_f32, ref, atol=1e-5, rtol=1e-5)

    print("KERNEL_OK")
</pallas_src>

<mosaic_0001>
module attributes {stable_mosaic.version = 11 : i64} {
  func.func @_patch_embed_kernel(%arg0: i32, %arg1: memref<16x48xbf16, #tpu.memory_space<vmem>>, %arg2: memref<48x32xbf16, #tpu.memory_space<vmem>>, %arg3: memref<1x32xf32, #tpu.memory_space<vmem>>, %arg4: memref<16x32xf32, #tpu.memory_space<vmem>>) attributes {dimension_semantics = [#tpu.dimension_semantics<parallel>], iteration_bounds = array<i64: 2>, scalar_prefetch = 0 : i64, scratch_operands = 0 : i64, tpu.core_type = #tpu.core_type<tc>, window_params = [{transform_indices = @transform_0, window_bounds = array<i64: 16, 48>}, {pipeline_mode = #tpu.pipeline_mode<synchronous>, transform_indices = @transform_1, window_bounds = array<i64: 48, 32>}, {pipeline_mode = #tpu.pipeline_mode<synchronous>, transform_indices = @transform_2, window_bounds = array<i64: 1, 32>}, {transform_indices = @transform_3, window_bounds = array<i64: 16, 32>}]} {
    %c0 = arith.constant 0 : index
    %c0_0 = arith.constant 0 : index
    %0 = vector.load %arg1[%c0, %c0_0] : memref<16x48xbf16, #tpu.memory_space<vmem>>, vector<16x48xbf16>
    %c0_1 = arith.constant 0 : index
    %c0_2 = arith.constant 0 : index
    %1 = vector.load %arg2[%c0_1, %c0_2] : memref<48x32xbf16, #tpu.memory_space<vmem>>, vector<48x32xbf16>
    %cst = arith.constant dense<0.000000e+00> : vector<16x32xf32>
    %2 = tpu.matmul %0, %1, %cst {dimension_numbers = #tpu.dot_dimension_numbers<[1], [0], [0], [1], [0, 0, 1, 1], [], []>} : vector<16x48xbf16>, vector<48x32xbf16>, vector<16x32xf32> -> vector<16x32xf32>
    %c0_3 = arith.constant 0 : index
    %c0_4 = arith.constant 0 : index
    %3 = vector.load %arg3[%c0_3, %c0_4] : memref<1x32xf32, #tpu.memory_space<vmem>>, vector<1x32xf32>
    %4 = vector.broadcast %3 : vector<1x32xf32> to vector<16x32xf32>
    %5 = arith.addf %2, %4 : vector<16x32xf32>
    %c0_5 = arith.constant 0 : index
    %c0_6 = arith.constant 0 : index
    %6 = vector.load %arg4[%c0_5, %c0_6] : memref<16x32xf32, #tpu.memory_space<vmem>>, vector<16x32xf32>
    tpu.vector_store %arg4[%c0_5, %c0_6], %5 {strides = array<i32>} : memref<16x32xf32, #tpu.memory_space<vmem>>, vector<16x32xf32>,
    return
  }
  func.func @transform_0(%arg0: i32) -> (i32, i32) {
    %c0_i32 = arith.constant 0 : i32
    %c0_i32_0 = arith.constant 0 : i32
    return %arg0, %c0_i32 : i32, i32
  }
  func.func @transform_1(%arg0: i32) -> (i32, i32) {
    %c0_i32 = arith.constant 0 : i32
    %c0_i32_0 = arith.constant 0 : i32
    %c0_i32_1 = arith.constant 0 : i32
    return %c0_i32, %c0_i32_0 : i32, i32
  }
  func.func @transform_2(%arg0: i32) -> (i32, i32) {
    %c0_i32 = arith.constant 0 : i32
    %c0_i32_0 = arith.constant 0 : i32
    %c0_i32_1 = arith.constant 0 : i32
    return %c0_i32, %c0_i32_0 : i32, i32
  }
  func.func @transform_3(%arg0: i32) -> (i32, i32) {
    %c0_i32 = arith.constant 0 : i32
    %c0_i32_0 = arith.constant 0 : i32
    return %arg0, %c0_i32 : i32, i32
  }
}

</mosaic_0001>

<llo_original>
// kernel: patch_module_forward_prepared.1
$region0: #{patch_module_forward_prepared.1}
  #allocation0 [shape = 'u32[]', space=smem, size = 0x4, offset = 0x4, fixed_abs, tag = 'smem constant byte address 0x4 - core index']
  #allocation1 [shape = 'u32[72,128]{1,0:T(1,128)}', space=vmem, size = 0x9000, scoped, tag = 'internal scratch']
  %s0 = inlined_call_operand.vmem [shape: bf16[32,48], index: 0, kind: input, shape index: {}]
  %s1 = inlined_call_operand.vmem [shape: bf16[48,32], index: 1, kind: input, shape index: {}]
  %s2 = inlined_call_operand.vmem [shape: f32[1,32], index: 2, kind: input, shape index: {}]
  %s3 = inlined_call_operand.hbm [shape: f32[32,32], index: 3, kind: output, shape index: {}]
  %s4 = sld [smem:[#allocation0]]
  $region45: #{patch_module_forward_prepared.1} parent=0
    _
  %s6 = ssub.s32 1, %s4
  %s7 = scalar_select 0, %s6, %s4
  $region1: #{patch_module_forward_prepared.1} parent=0
    #allocation2 [shape = 'u8[16384]{0}', space=vmem, size = 0x4000, scoped, tag = 'output window, operand 0']
    #allocation3 [shape = 's32[2]{0}', space=sflag, size = 0x8, scoped, tag = 'scoped memory for patch_module_forward_prepared.1']
    %8 = vsyncpa [#allocation3], 0
    %s9 = scalar_lea.sflag [#allocation3], 1
    %10 = vsyncpa %s9, 0
    loop: start=0, step=1, limit=4
    $region2: #{patch_module_forward_prepared.1} parent=1 // loop_pre_header
      _
    $region3: #{patch_module_forward_prepared.1} parent=1 // loop_header
      %s12 = sphi 0, %s16
      %p13 = scmp.ge.s32.totalorder %s12, 4
      %s22 = sphi 0, %s24
      %s25 = sphi 0, %s22
      %s26 = sphi 0, %s25
      %s42 = sphi 0, %s26
      %s46 = sphi 0, %s46
      %s48 = sphi 0, %s46
      %s49 = sphi 0, %s48
      %s63 = sphi 0, %s49
      %s67 = sphi 0, %s67
      %s69 = sphi 0, %s67
      %s70 = sphi 0, %s69
      %s84 = sphi 0, %s70
      %s90 = sphi 0, %s92
      %s93 = sphi 0, %s90
      %s94 = sphi 0, %s93
      %s110 = sphi 0, %s94
    $region4: #{patch_module_forward_prepared.1} parent=1 // loop_header_branch
      %15 = sbr.rel (%p13) target = $region8
    $region5: #{patch_module_forward_prepared.1} parent=1 // loop_body
      %s17 = ssub.s32 %s12, 1
      %s18 = ssub.s32 %s12, 2
      %s19 = sadd.s32 %s12, 1
      %s20 = ssub.s32 %s12, %s19
      %p21 = scmp.eq.s32.totalorder %s20, 0
      %s23 = sadd.s32 %s22, 1
      %s24 = scalar_select %p21, %s22, %s23
      %p27 = pneg %p21
      %p28 = scmp.eq.s32.totalorder %s12, 1
      %p29 = por %p27, %p28
      %p30 = scmp.ne.s32.totalorder %s22, %s25
      %p31 = scmp.eq.s32.totalorder %s12, 0
      %p32 = por %p30, %p31
      %p33 = scmp.ne.s32.totalorder %s22, %s25
      %p34 = scmp.eq.s32.totalorder %s17, 1
      %p35 = por %p33, %p34
      %p36 = scmp.ne.s32.totalorder %s25, %s26
      %p37 = scmp.eq.s32.totalorder %s17, 0
      %p38 = por %p36, %p37
      %p39 = scmp.ne.s32.totalorder %s25, %s26
      %p40 = scmp.eq.s32.totalorder %s18, 1
      %p41 = por %p39, %p40
      %p43 = scmp.ne.s32.totalorder %s26, %s42
      %p44 = scmp.eq.s32.totalorder %s18, 0
      %p45 = por %p43, %p44
      %s47 = sadd.s32 %s46, 1
      %p50 = scmp.eq.s32.totalorder %s12, 1
      %p51 = scmp.ne.s32.totalorder %s46, %s48
      %p52 = scmp.eq.s32.totalorder %s12, 0
      %p53 = por %p51, %p52
      %p54 = scmp.ne.s32.totalorder %s46, %s48
      %p55 = scmp.eq.s32.totalorder %s17, 1
      %p56 = por %p54, %p55
      %p57 = scmp.ne.s32.totalorder %s48, %s49
      %p58 = scmp.eq.s32.totalorder %s17, 0
      %p59 = por %p57, %p58
      %p60 = scmp.ne.s32.totalorder %s48, %s49
      %p61 = scmp.eq.s32.totalorder %s18, 1
      %p62 = por %p60, %p61
      %p64 = scmp.ne.s32.totalorder %s49, %s63
      %p65 = scmp.eq.s32.totalorder %s18, 0
      %p66 = por %p64, %p65
      %s68 = sadd.s32 %s67, 1
      %p71 = scmp.eq.s32.totalorder %s12, 1
      %p72 = scmp.ne.s32.totalorder %s67, %s69
      %p73 = scmp.eq.s32.totalorder %s12, 0
      %p74 = por %p72, %p73
      %p75 = scmp.ne.s32.totalorder %s67, %s69
      %p76 = scmp.eq.s32.totalorder %s17, 1
      %p77 = por %p75, %p76
      %p78 = scmp.ne.s32.totalorder %s69, %s70
      %p79 = scmp.eq.s32.totalorder %s17, 0
      %p80 = por %p78, %p79
      %p81 = scmp.ne.s32.totalorder %s69, %s70
      %p82 = scmp.eq.s32.totalorder %s18, 1
      %p83 = por %p81, %p82
      %p85 = scmp.ne.s32.totalorder %s70, %s84
      %p86 = scmp.eq.s32.totalorder %s18, 0
      %p87 = por %p85, %p86
      %s88 = ssub.s32 %s12, %s19
      %p89 = scmp.eq.s32.totalorder %s88, 0
      %s91 = sadd.s32 %s90, 1
      %s92 = scalar_select %p89, %s90, %s91
      %p95 = pneg %p89
      %p96 = scmp.eq.s32.totalorder %s12, 1
      %p97 = por %p95, %p96
      %p98 = scmp.ne.s32.totalorder %s90, %s93
      %p99 = scmp.eq.s32.totalorder %s12, 0
      %p100 = por %p98, %p99
      %p101 = scmp.ne.s32.totalorder %s90, %s93
      %p102 = scmp.eq.s32.totalorder %s17, 1
      %p103 = por %p101, %p102
      %p104 = scmp.ne.s32.totalorder %s93, %s94
      %p105 = scmp.eq.s32.totalorder %s17, 0
      %p106 = por %p104, %p105
      %p107 = scmp.ne.s32.totalorder %s93, %s94
      %p108 = scmp.eq.s32.totalorder %s18, 1
      %p109 = por %p107, %p108
      %p111 = scmp.ne.s32.totalorder %s94, %s110
      %p112 = scmp.eq.s32.totalorder %s18, 0
      %p113 = por %p111, %p112
      %p114 = scmp.le.s32.totalorder 1, %s12
      %p115 = scmp.lt.s32.totalorder %s12, 3
      %p116 = pnand %p114, %p115
      %p117 = pneg %p116
      // Predicated region
      $region9: #{patch_module_forward_prepared.1} parent=5 // pred_check
        _
      $region10: #{patch_module_forward_prepared.1} parent=5 // pred_check_branch
        %119 = sbr.rel (%p116) target = $region12
      $region11: #{patch_module_forward_prepared.1} parent=5 // pred_region
        %s120 = ssub.s32 %s12, 1
        // Predicated region
        $region13: #{patch_module_forward_prepared.1} parent=11 // pred_check
          %p121 = pneg %p59
        $region14: #{patch_module_forward_prepared.1} parent=11 // pred_check_branch
          %123 = sbr.rel (%p121) target = $region16
        $region15: #{patch_module_forward_prepared.1} parent=11 // pred_region
          _
        $region16: #{patch_module_forward_prepared.1} parent=11 // pred_fallthru
          _
        // Predicated region
        $region17: #{patch_module_forward_prepared.1} parent=11 // pred_check
          %p124 = pneg %p80
        $region18: #{patch_module_forward_prepared.1} parent=11 // pred_check_branch
          %126 = sbr.rel (%p124) target = $region20
        $region19: #{patch_module_forward_prepared.1} parent=11 // pred_region
          _
        $region20: #{patch_module_forward_prepared.1} parent=11 // pred_fallthru
          _
      $region12: #{patch_module_forward_prepared.1} parent=5 // pred_fallthru
        _
      %p127 = scmp.lt.s32.totalorder %s12, 2
      // Predicated region
      $region21: #{patch_module_forward_prepared.1} parent=5 // pred_check
        %p128 = pneg %p127
      $region22: #{patch_module_forward_prepared.1} parent=5 // pred_check_branch
        %130 = sbr.rel (%p128) target = $region24
      $region23: #{patch_module_forward_prepared.1} parent=5 // pred_region
        // Predicated region
        $region25: #{patch_module_forward_prepared.1} parent=23 // pred_check
          %p131 = pneg %p32
        $region26: #{patch_module_forward_prepared.1} parent=23 // pred_check_branch
          %133 = sbr.rel (%p131) target = $region28
        $region27: #{patch_module_forward_prepared.1} parent=23 // pred_region
          %s134 = smul.u32 2, %s12
          %p135 = scmp.lt.s32.totalorder %s134, 3
          %s136 = scalar_select %p135, %s134, 3
          %s137 = smul.addr %s136, 4
          %s138 = scalar_lea.vmem %s0, %s137
          %s139 = smul.u32 2, %s12
        $region28: #{patch_module_forward_prepared.1} parent=23 // pred_fallthru
          _
      $region24: #{patch_module_forward_prepared.1} parent=5 // pred_fallthru
        _
      %p140 = scmp.le.s32.totalorder 1, %s12
      %p141 = scmp.lt.s32.totalorder %s12, 3
      %p142 = pnand %p140, %p141
      %p143 = pneg %p142
      // Predicated region
      $region29: #{patch_module_forward_prepared.1} parent=5 // pred_check
        _
      $region30: #{patch_module_forward_prepared.1} parent=5 // pred_check_branch
        %145 = sbr.rel (%p142) target = $region32
      $region31: #{patch_module_forward_prepared.1} parent=5 // pred_region
        %s146 = ssub.s32 %s12, 1
        %s147 = smul.u32 2, %s17
        %p148 = scmp.lt.s32.totalorder %s147, 3
        %s149 = scalar_select %p148, %s147, 3
        %s150 = smul.addr %s149, 4
        %s151 = scalar_lea.vmem %s0, %s150
        %p152 = pneg %p38
        %p153 = pneg %p35
        %p154 = pneg %p59
        %p155 = pneg %p56
        %p156 = pneg %p80
        %p157 = pneg %p77
        %p158 = pneg %p106
        %p159 = pneg %p103
        %s160 = sand.u32 %s93, 1
        %s161 = scalar_lea.sflag [#allocation3], %s160
        %s162 = sand.u32 %s93, 1
        %s163 = smul.addr %s162, 16
        %s164 = scalar_lea.vmem [#allocation2], %s163
        %s165 = smul.u32 2, %s17
        %p166 = scmp.lt.s32.totalorder %s165, 3
        %s167 = scalar_select %p166, %s165, 3
        %s168 = smul.addr %s167, 4
        %s169 = scalar_lea.vmem %s0, %s168
        %s170 = smul.u32 2, %s17
        %s171 = smul.u32 2, %s17
        %v173 = vld [vmem:[%s169] sm:$0xf]
        %v174 = vld [vmem:[%s169 + $0x4] sm:$0xf]
        %v175 = vld [vmem:[%s1] sm:$0xf]
        %v176 = vld [vmem:[%s1 + $0x4] sm:$0xf]
        %v177 = vld [vmem:[%s1 + $0x8] sm:$0xf]
        %v178 = vld [vmem:[%s1 + $0xc] sm:$0xf]
        %v179 = vld [vmem:[%s1 + $0x10] sm:$0xf]
        %v180 = vld [vmem:[%s1 + $0x14] sm:$0xf]
        %v181 = vld [vmem:[%s2] sm:$0x1]
        %v183 = vperm.slane %v181, 0
        %v187 = vunpack.c.l.b16 %v173
        %v188 = vunpack.c.l.b16 %v174
        %v189 = vpack.c.b16 %v188, %v187
        %v196 = vunpack.c.l.b16 %v175
        %v197 = vunpack.c.l.b16 %v176
        %v198 = vunpack.c.l.b16 %v177
        %v199 = vunpack.c.l.b16 %v178
        %v200 = vunpack.c.l.b16 %v179
        %v201 = vunpack.c.l.b16 %v180
        %v202 = vpack.c.b16 %v197, %v196
        %v203 = vpack.c.b16 %v199, %v198
        %v204 = vpack.c.b16 %v201, %v200
        %vm208 = vcmask 392192
        %v210 = vsel %vm208, %v189, 0
        %212 = vmatpush.bf16.msra.mxu0 0
        %213 = vmatpush.bf16.msra.mxu0 0
        %214 = vmatpush.bf16.msra.mxu0 0
        %215 = vmatpush.bf16.msra.mxu0 0
        %216 = vmatpush.bf16.msra.mxu0 0
        %217 = vmatpush.bf16.msra.mxu0 %v204
        %218 = vmatpush.bf16.msra.mxu0 %v203
        %219 = vmatpush.bf16.msra.mxu0 %v202
        %220 = vmatmul.bf16.gmra.mxu0 %v210
        %v221 = vpop.f32.mrf.mxu0
        %v222 = vadd.f32 %v183, %v221
        %v223 = vpop.f32.mrf.mxu0
        %v224 = vadd.f32 %v183, %v223
        %225 = vdwg.mxu0
        %vm226 = vcmask 261120
        %227 = vst.msk [vmem:[%s164] sm:$0xff] %vm226, %v222
        %228 = vst.msk [vmem:[%s164 + $0x8] sm:$0xff] %vm226, %v224
        %s229 = sand.u32 %s93, 1
        %s230 = scalar_lea.sflag [#allocation3], %s229
        %s231 = sand.u32 %s93, 1
        %s232 = smul.addr %s231, 16
        %s233 = scalar_lea.vmem [#allocation2], %s232
        // Predicated region
        $region33: #{patch_module_forward_prepared.1} parent=31 // pred_check
          %p234 = pneg %p103
        $region34: #{patch_module_forward_prepared.1} parent=31 // pred_check_branch
          %236 = sbr.rel (%p234) target = $region36
        $region35: #{patch_module_forward_prepared.1} parent=31 // pred_region
          %s237 = smul.u32 2, %s17
          %239 = vsyncadd %s230, 0
          %s240 = smul.addr %s237, 8
          %s241 = scalar_lea.hbm %s3, %s240
          %s242 = sshll.u32 %s233, 4
          %s243 = int_to_ptr.vmem [resolvable:$true] %s242
          %s244 = sshll.u32 %s241, 4
          %s245 = int_to_ptr.hbm [resolvable:$true] %s244
          %250 = dma.vmem_to_hbm [thread:$0]  %s243, 256, %s245, %s230, 128, 128, 8
        $region36: #{patch_module_forward_prepared.1} parent=31 // pred_fallthru
          _
      $region32: #{patch_module_forward_prepared.1} parent=5 // pred_fallthru
        _
      %p251 = scmp.le.s32.totalorder 2, %s12
      // Predicated region
      $region37: #{patch_module_forward_prepared.1} parent=5 // pred_check
        %p252 = pneg %p251
      $region38: #{patch_module_forward_prepared.1} parent=5 // pred_check_branch
        %254 = sbr.rel (%p252) target = $region40
      $region39: #{patch_module_forward_prepared.1} parent=5 // pred_region
        %s255 = ssub.s32 %s12, 2
        // Predicated region
        $region41: #{patch_module_forward_prepared.1} parent=39 // pred_check
          %p256 = pneg %p109
        $region42: #{patch_module_forward_prepared.1} parent=39 // pred_check_branch
          %258 = sbr.rel (%p256) target = $region44
        $region43: #{patch_module_forward_prepared.1} parent=39 // pred_region
          %s259 = sand.u32 %s94, 1
          %s260 = scalar_lea.sflag [#allocation3], %s259
          %s261 = sand.u32 %s94, 1
          %s262 = smul.addr %s261, 16
          %s263 = scalar_lea.vmem [#allocation2], %s262
          %265 = dma.done %s260, 256
        $region44: #{patch_module_forward_prepared.1} parent=39 // pred_fallthru
          _
      $region40: #{patch_module_forward_prepared.1} parent=5 // pred_fallthru
        _
    $region6: #{patch_module_forward_prepared.1} parent=1 // loop_footer
      %s16 = sadd.s32 1, %s12
    $region7: #{patch_module_forward_prepared.1} parent=1 // loop_footer_branch
      %11 = sbr.rel target = $region3
    $region8: #{patch_module_forward_prepared.1} parent=1 // loop_exit
      _
    %266 = vsyncpa [#allocation3], 1
    %s267 = scalar_lea.sflag [#allocation3], 1
    %268 = vsyncpa %s267, 1

</llo_original>
